<compile_context>
chip_gen: v7x
topology: tpu7x:2x2x1
jax: 0.10.0
libtpu: 0.0.40
codegen_flags: <defaults>
</compile_context>

<pallas_src>
import functools

import jax
import jax.numpy as jnp
from jax.experimental import pallas as pl
from jax.experimental.pallas import tpu as pltpu


def _round_up(x, m):
    return ((x + m - 1) // m) * m


# ----------------------------------------------------------------------------
# Kernels
# ----------------------------------------------------------------------------
def _normalize_channel_kernel(x_ref, o_ref, *, power):
    """Block (1, C, TILE_S): reduce over the channel (sublane) axis."""
    x = x_ref[...].astype(jnp.float32)
    if power == 2:
        s = jnp.sum(x * x, axis=1, keepdims=True)
        y = x * jax.lax.rsqrt(s)                      # rsqrt runs on the EUP
    else:
        n = jnp.power(jnp.sum(jnp.power(x, power), axis=1, keepdims=True),
                      1.0 / power)
        y = x / n
    o_ref[...] = y.astype(o_ref.dtype)


def _normalize_row_kernel(x_ref, o_ref, *, power):
    """Block (TILE_M, D): reduce over the last (lane) axis (2-D inputs)."""
    x = x_ref[...].astype(jnp.float32)
    if power == 2:
        s = jnp.sum(x * x, axis=-1, keepdims=True)
        y = x * jax.lax.rsqrt(s)
    else:
        n = jnp.power(jnp.sum(jnp.power(x, power), axis=-1, keepdims=True),
                      1.0 / power)
        y = x / n
    o_ref[...] = y.astype(o_ref.dtype)


# ----------------------------------------------------------------------------
# Wrappers
# ----------------------------------------------------------------------------
def _normalize_nd(x, power):
    """x: (N, C, *spatial). Normalize along dim 1, spatial kept on lanes."""
    orig_shape = x.shape
    n, c = orig_shape[0], orig_shape[1]
    s = 1
    for d in orig_shape[2:]:
        s *= d
    x3 = x.reshape(n, c, s)

    # Lane tile: multiple of 128, capped so double-buffered tiles stay small.
    tile_s = min(_round_up(s, 128), 2048)
    s_pad = _round_up(s, tile_s)
    if s_pad != s:
        # Pad with 1.0 so padded columns never produce inf/NaN (sliced off).
        x3 = jnp.pad(x3, ((0, 0), (0, 0), (0, s_pad - s)),
                     constant_values=1.0)

    grid = (n, s_pad // tile_s)
    kernel = functools.partial(_normalize_channel_kernel, power=power)
    out = pl.pallas_call(
        kernel,
        out_shape=jax.ShapeDtypeStruct((n, c, s_pad), x.dtype),
        grid=grid,
        in_specs=[pl.BlockSpec((1, c, tile_s), lambda b, j: (b, 0, j))],
        out_specs=pl.BlockSpec((1, c, tile_s), lambda b, j: (b, 0, j)),
        compiler_params=pltpu.CompilerParams(
            dimension_semantics=("parallel", "parallel")),
    )(x3)
    if s_pad != s:
        out = out[:, :, :s]
    return out.reshape(orig_shape)


def _normalize_2d(x, power):
    """x: (N, D). Normalize along dim 1 (== last axis, the lane axis)."""
    m, d = x.shape
    tile_m = min(_round_up(m, 8), 1024)
    m_pad = _round_up(m, tile_m)
    xp = x
    if m_pad != m:
        xp = jnp.pad(x, ((0, m_pad - m), (0, 0)), constant_values=1.0)

    grid = (m_pad // tile_m,)
    kernel = functools.partial(_normalize_row_kernel, power=power)
    out = pl.pallas_call(
        kernel,
        out_shape=jax.ShapeDtypeStruct((m_pad, d), x.dtype),
        grid=grid,
        in_specs=[pl.BlockSpec((tile_m, d), lambda i: (i, 0))],
        out_specs=pl.BlockSpec((tile_m, d), lambda i: (i, 0)),
        compiler_params=pltpu.CompilerParams(
            dimension_semantics=("parallel",)),
    )(xp)
    if m_pad != m:
        out = out[:m]
    return out


class NormalizePallas:
    """Pallas equivalent of the PyTorch `Normalize` module (dim=1)."""

    def __init__(self, power=2):
        self.power = power

    def __call__(self, x):
        if x.ndim >= 3:
            return _normalize_nd(x, self.power)
        if x.ndim == 2:
            return _normalize_2d(x, self.power)
        raise ValueError("Normalize expects an input of rank >= 2")


# ----------------------------------------------------------------------------
# Reference + main
# ----------------------------------------------------------------------------
def _normalize_ref(x, power=2):
    n = jnp.power(jnp.sum(jnp.power(x, power), axis=1, keepdims=True),
                  1.0 / power)
    return x / n


if __name__ == "__main__":
    key = jax.random.PRNGKey(0)
    k1, k2 = jax.random.split(key)

    # 4-D NCHW input (small): batch=2, channels=4, spatial=16x16.
    x4 = jax.random.normal(k1, (2, 4, 16, 16), dtype=jnp.float32)
    # 2-D feature-vector input: batch=8, feat=256 (second code path).
    x2 = jax.random.normal(k2, (8, 256), dtype=jnp.float32)

    norm = NormalizePallas(power=2)
    f4 = jax.jit(lambda a: norm(a))
    f2 = jax.jit(lambda a: norm(a))

    y4 = f4(x4)
    y2 = f2(x2)
    jax.block_until_ready((y4, y2))

    r4 = _normalize_ref(x4)
    r2 = _normalize_ref(x2)

    assert y4.shape == x4.shape and y4.dtype == x4.dtype
    assert y2.shape == x2.shape and y2.dtype == x2.dtype
    assert jnp.allclose(y4, r4, rtol=1e-5, atol=1e-5)
    assert jnp.allclose(y2, r2, rtol=1e-5, atol=1e-5)

    print("KERNEL_OK")
</pallas_src>

<mosaic_0001>
module attributes {stable_mosaic.version = 11 : i64} {
  func.func @_normalize_channel_kernel(%arg0: i32, %arg1: i32, %arg2: memref<1x4x256xf32, #tpu.memory_space<vmem>>, %arg3: memref<1x4x256xf32, #tpu.memory_space<vmem>>) attributes {dimension_semantics = [#tpu.dimension_semantics<parallel>, #tpu.dimension_semantics<parallel>], iteration_bounds = array<i64: 2, 1>, scalar_prefetch = 0 : i64, scratch_operands = 0 : i64, tpu.core_type = #tpu.core_type<tc>, window_params = [{transform_indices = @transform_0, window_bounds = array<i64: 1, 4, 256>}, {transform_indices = @transform_1, window_bounds = array<i64: 1, 4, 256>}]} {
    %c0 = arith.constant 0 : index
    %c0_0 = arith.constant 0 : index
    %c0_1 = arith.constant 0 : index
    %0 = vector.load %arg2[%c0, %c0_0, %c0_1] : memref<1x4x256xf32, #tpu.memory_space<vmem>>, vector<1x4x256xf32>
    %1 = arith.mulf %0, %0 : vector<1x4x256xf32>
    %cst = arith.constant dense<0.000000e+00> : vector<1x256xf32>
    %2 = vector.multi_reduction <add>, %1, %cst [1] : vector<1x4x256xf32> to vector<1x256xf32>
    %3 = vector.shape_cast %2 : vector<1x256xf32> to vector<1x1x256xf32>
    %4 = math.rsqrt %3 : vector<1x1x256xf32>
    %5 = vector.broadcast %4 : vector<1x1x256xf32> to vector<1x4x256xf32>
    %6 = arith.mulf %0, %5 : vector<1x4x256xf32>
    %c0_2 = arith.constant 0 : index
    %c0_3 = arith.constant 0 : index
    %c0_4 = arith.constant 0 : index
    %7 = vector.load %arg3[%c0_2, %c0_3, %c0_4] : memref<1x4x256xf32, #tpu.memory_space<vmem>>, vector<1x4x256xf32>
    tpu.vector_store %arg3[%c0_2, %c0_3, %c0_4], %6 {strides = array<i32>} : memref<1x4x256xf32, #tpu.memory_space<vmem>>, vector<1x4x256xf32>,
    return
  }
  func.func @transform_0(%arg0: i32, %arg1: i32) -> (i32, i32, i32) {
    %c0_i32 = arith.constant 0 : i32
    %c0_i32_0 = arith.constant 0 : i32
    return %arg0, %c0_i32, %arg1 : i32, i32, i32
  }
  func.func @transform_1(%arg0: i32, %arg1: i32) -> (i32, i32, i32) {
    %c0_i32 = arith.constant 0 : i32
    %c0_i32_0 = arith.constant 0 : i32
    return %arg0, %c0_i32, %arg1 : i32, i32, i32
  }
}

</mosaic_0001>

<llo_original>
// kernel: _lambda_.1
$region0: #{_lambda_.1}
  #allocation0 [shape = 'u32[]', space=smem, size = 0x4, offset = 0x4, fixed_abs, tag = 'smem constant byte address 0x4 - core index']
  #allocation1 [shape = 'u32[144,128]{1,0:T(1,128)}', space=vmem, size = 0x12000, scoped, tag = 'internal scratch']
  %s0 = inlined_call_operand.vmem [shape: f32[2,4,256], index: 0, kind: input, shape index: {}]
  %s1 = inlined_call_operand.vmem [shape: f32[2,4,256], index: 1, kind: output, shape index: {}]
  %s2 = sld [smem:[#allocation0]]
  $region37: #{_lambda_.1} parent=0
    _
  %s4 = ssub.s32 1, %s2
  %s5 = scalar_select 0, %s4, %s2
  loop: start=0, step=1, limit=4
  $region2: #{_lambda_.1} parent=0 // loop_pre_header
    _
  $region3: #{_lambda_.1} parent=0 // loop_header
    %s7 = sphi 0, %s11
    %p8 = scmp.ge.s32.totalorder %s7, 4
    %s14 = sphi 0, %s26
    %s15 = sphi 0, %s22
    %s16 = sphi 0, %s14
    %s17 = sphi 0, %s15
    %s18 = sphi 0, %s16
    %s19 = sphi 0, %s17
    %s31 = sphi 0, %s33
    %s34 = sphi 0, %s31
    %s35 = sphi 0, %s34
    %s51 = sphi 0, %s35
    %s59 = sphi 0, %s61
    %s62 = sphi 0, %s59
    %s63 = sphi 0, %s62
    %s79 = sphi 0, %s63
  $region4: #{_lambda_.1} parent=0 // loop_header_branch
    %10 = sbr.rel (%p8) target = $region8
  $region5: #{_lambda_.1} parent=0 // loop_body
    %s12 = ssub.s32 %s7, 1
    %s13 = ssub.s32 %s7, 2
    %s20 = sadd.s32 1, %s15
    %p21 = scmp.ge.s32.totalorder %s20, 1
    %s22 = scalar_select %p21, 0, %s20
    %s23 = sadd.s32 1, %s14
    %s24 = scalar_select %p21, %s23, %s14
    %p25 = scmp.ge.s32.totalorder %s24, 2
    %s26 = scalar_select %p25, 0, %s24
    %s27 = ssub.s32 %s14, %s26
    %s28 = ssub.s32 %s15, %s22
    %s29 = sor.u32 %s27, %s28
    %p30 = scmp.eq.s32.totalorder %s29, 0
    %s32 = sadd.s32 %s31, 1
    %s33 = scalar_select %p30, %s31, %s32
    %p36 = pneg %p30
    %p37 = scmp.eq.s32.totalorder %s7, 1
    %p38 = por %p36, %p37
    %p39 = scmp.ne.s32.totalorder %s31, %s34
    %p40 = scmp.eq.s32.totalorder %s7, 0
    %p41 = por %p39, %p40
    %p42 = scmp.ne.s32.totalorder %s31, %s34
    %p43 = scmp.eq.s32.totalorder %s12, 1
    %p44 = por %p42, %p43
    %p45 = scmp.ne.s32.totalorder %s34, %s35
    %p46 = scmp.eq.s32.totalorder %s12, 0
    %p47 = por %p45, %p46
    %p48 = scmp.ne.s32.totalorder %s34, %s35
    %p49 = scmp.eq.s32.totalorder %s13, 1
    %p50 = por %p48, %p49
    %p52 = scmp.ne.s32.totalorder %s35, %s51
    %p53 = scmp.eq.s32.totalorder %s13, 0
    %p54 = por %p52, %p53
    %s55 = ssub.s32 %s14, %s26
    %s56 = ssub.s32 %s15, %s22
    %s57 = sor.u32 %s55, %s56
    %p58 = scmp.eq.s32.totalorder %s57, 0
    %s60 = sadd.s32 %s59, 1
    %s61 = scalar_select %p58, %s59, %s60
    %p64 = pneg %p58
    %p65 = scmp.eq.s32.totalorder %s7, 1
    %p66 = por %p64, %p65
    %p67 = scmp.ne.s32.totalorder %s59, %s62
    %p68 = scmp.eq.s32.totalorder %s7, 0
    %p69 = por %p67, %p68
    %p70 = scmp.ne.s32.totalorder %s59, %s62
    %p71 = scmp.eq.s32.totalorder %s12, 1
    %p72 = por %p70, %p71
    %p73 = scmp.ne.s32.totalorder %s62, %s63
    %p74 = scmp.eq.s32.totalorder %s12, 0
    %p75 = por %p73, %p74
    %p76 = scmp.ne.s32.totalorder %s62, %s63
    %p77 = scmp.eq.s32.totalorder %s13, 1
    %p78 = por %p76, %p77
    %p80 = scmp.ne.s32.totalorder %s63, %s79
    %p81 = scmp.eq.s32.totalorder %s13, 0
    %p82 = por %p80, %p81
    %p83 = scmp.le.s32.totalorder 1, %s7
    %p84 = scmp.lt.s32.totalorder %s7, 3
    %p85 = pnand %p83, %p84
    %p86 = pneg %p85
    // Predicated region
    $region9: #{_lambda_.1} parent=5 // pred_check
      _
    $region10: #{_lambda_.1} parent=5 // pred_check_branch
      %88 = sbr.rel (%p85) target = $region12
    $region11: #{_lambda_.1} parent=5 // pred_region
      %s89 = ssub.s32 %s7, 1
    $region12: #{_lambda_.1} parent=5 // pred_fallthru
      _
    %p90 = scmp.lt.s32.totalorder %s7, 2
    // Predicated region
    $region13: #{_lambda_.1} parent=5 // pred_check
      %p91 = pneg %p90
    $region14: #{_lambda_.1} parent=5 // pred_check_branch
      %93 = sbr.rel (%p91) target = $region16
    $region15: #{_lambda_.1} parent=5 // pred_region
      // Predicated region
      $region17: #{_lambda_.1} parent=15 // pred_check
        %p94 = pneg %p41
      $region18: #{_lambda_.1} parent=15 // pred_check_branch
        %96 = sbr.rel (%p94) target = $region20
      $region19: #{_lambda_.1} parent=15 // pred_region
        %s97 = smul.u32 2, %s15
        %p98 = scmp.lt.s32.totalorder %s14, 1
        %s99 = scalar_select %p98, %s14, 1
        %p100 = scmp.lt.s32.totalorder %s97, 1
        %s101 = scalar_select %p100, %s97, 1
        %s102 = smul.addr %s99, 2
        %s103 = sadd.s32 %s101, %s102
        %s104 = smul.addr %s103, 4
        %s105 = scalar_lea.vmem %s0, %s104
        %s106 = smul.u32 2, %s15
      $region20: #{_lambda_.1} parent=15 // pred_fallthru
        _
    $region16: #{_lambda_.1} parent=5 // pred_fallthru
      _
    %p107 = scmp.le.s32.totalorder 1, %s7
    %p108 = scmp.lt.s32.totalorder %s7, 3
    %p109 = pnand %p107, %p108
    %p110 = pneg %p109
    // Predicated region
    $region21: #{_lambda_.1} parent=5 // pred_check
      _
    $region22: #{_lambda_.1} parent=5 // pred_check_branch
      %112 = sbr.rel (%p109) target = $region24
    $region23: #{_lambda_.1} parent=5 // pred_region
      %s113 = ssub.s32 %s7, 1
      %s114 = smul.u32 2, %s17
      %p115 = scmp.lt.s32.totalorder %s16, 1
      %s116 = scalar_select %p115, %s16, 1
      %p117 = scmp.lt.s32.totalorder %s114, 1
      %s118 = scalar_select %p117, %s114, 1
      %s119 = smul.addr %s116, 2
      %s120 = sadd.s32 %s118, %s119
      %s121 = smul.addr %s120, 4
      %s122 = scalar_lea.vmem %s0, %s121
      %p123 = pneg %p47
      %p124 = pneg %p44
      %p125 = pneg %p75
      %p126 = pneg %p72
      %s127 = smul.u32 2, %s17
      %p128 = scmp.lt.s32.totalorder %s16, 1
      %s129 = scalar_select %p128, %s16, 1
      %p130 = scmp.lt.s32.totalorder %s127, 1
      %s131 = scalar_select %p130, %s127, 1
      %s132 = smul.addr %s129, 2
      %s133 = sadd.s32 %s131, %s132
      %s134 = smul.addr %s133, 4
      %s135 = scalar_lea.vmem %s1, %s134
      %s136 = smul.u32 2, %s17
      %p137 = scmp.lt.s32.totalorder %s16, 1
      %s138 = scalar_select %p137, %s16, 1
      %p139 = scmp.lt.s32.totalorder %s136, 1
      %s140 = scalar_select %p139, %s136, 1
      %s141 = smul.addr %s138, 2
      %s142 = sadd.s32 %s140, %s141
      %s143 = smul.addr %s142, 4
      %s144 = scalar_lea.vmem %s0, %s143
      %s145 = smul.u32 2, %s17
      %s146 = smul.u32 2, %s17
      %p147 = scmp.lt.s32.totalorder %s16, 1
      %s148 = scalar_select %p147, %s16, 1
      %p149 = scmp.lt.s32.totalorder %s146, 1
      %s150 = scalar_select %p149, %s146, 1
      %s151 = smul.addr %s148, 2
      %s152 = sadd.s32 %s150, %s151
      %s153 = smul.addr %s152, 4
      %s154 = scalar_lea.vmem %s1, %s153
      %s155 = smul.u32 2, %s17
      %v156 = vld [vmem:[%s144] sm:$0xff]
      %v157 = vmul.f32 %v156, %v156
      %v159 = vcombine.high %v157, %v157
      %vm161 = vcmask 1043456
      %v162 = vsel %vm161, %v157, 0.0
      %v163 = vrot.slane %v162, 4
      %v164 = vadd.f32 %v162, %v163
      %v165 = vrot.slane %v164, 2
      %v166 = vadd.f32 %v164, %v165
      %v167 = vrot.slane %v166, 1
      %v168 = vadd.f32 %v166, %v167
      %v169 = vsel %vm161, %v159, 0.0
      %v170 = vrot.slane %v169, 4
      %v171 = vadd.f32 %v169, %v170
      %v172 = vrot.slane %v171, 2
      %v173 = vadd.f32 %v171, %v172
      %v174 = vrot.slane %v173, 1
      %v175 = vadd.f32 %v173, %v174
      %v176 = vrsqrt.pop %v168
      %v177 = vrsqrt.pop %v175
      %v180 = vcombine.low %v176, %v177
      %v182 = vmul.f32 %v156, %v180
      %183 = vst [vmem:[%s154] sm:$0xff] %v182
      %s184 = smul.u32 2, %s17
      %p185 = scmp.lt.s32.totalorder %s16, 1
      %s186 = scalar_select %p185, %s16, 1
      %p187 = scmp.lt.s32.totalorder %s184, 1
      %s188 = scalar_select %p187, %s184, 1
      %s189 = smul.addr %s186, 2
      %s190 = sadd.s32 %s188, %s189
      %s191 = smul.addr %s190, 4
      %s192 = scalar_lea.vmem %s1, %s191
      // Predicated region
      $region25: #{_lambda_.1} parent=23 // pred_check
        %p193 = pneg %p72
      $region26: #{_lambda_.1} parent=23 // pred_check_branch
        %195 = sbr.rel (%p193) target = $region28
      $region27: #{_lambda_.1} parent=23 // pred_region
        %s196 = smul.u32 2, %s17
      $region28: #{_lambda_.1} parent=23 // pred_fallthru
        _
    $region24: #{_lambda_.1} parent=5 // pred_fallthru
      _
    %p197 = scmp.le.s32.totalorder 2, %s7
    // Predicated region
    $region29: #{_lambda_.1} parent=5 // pred_check
      %p198 = pneg %p197
    $region30: #{_lambda_.1} parent=5 // pred_check_branch
      %200 = sbr.rel (%p198) target = $region32
    $region31: #{_lambda_.1} parent=5 // pred_region
      %s201 = ssub.s32 %s7, 2
      // Predicated region
      $region33: #{_lambda_.1} parent=31 // pred_check
        %p202 = pneg %p78
      $region34: #{_lambda_.1} parent=31 // pred_check_branch
        %204 = sbr.rel (%p202) target = $region36
      $region35: #{_lambda_.1} parent=31 // pred_region
        %s205 = smul.u32 2, %s19
        %p206 = scmp.lt.s32.totalorder %s18, 1
        %s207 = scalar_select %p206, %s18, 1
        %p208 = scmp.lt.s32.totalorder %s205, 1
        %s209 = scalar_select %p208, %s205, 1
        %s210 = smul.addr %s207, 2
        %s211 = sadd.s32 %s209, %s210
        %s212 = smul.addr %s211, 4
        %s213 = scalar_lea.vmem %s1, %s212
      $region36: #{_lambda_.1} parent=31 // pred_fallthru
        _
    $region32: #{_lambda_.1} parent=5 // pred_fallthru
      _
  $region6: #{_lambda_.1} parent=0 // loop_footer
    %s11 = sadd.s32 1, %s7
  $region7: #{_lambda_.1} parent=0 // loop_footer_branch
    %6 = sbr.rel target = $region3
  $region8: #{_lambda_.1} parent=0 // loop_exit
    _

</llo_original>
